<compile_context>
chip_gen: v6e
topology: v6e:2x2x1
jax: 0.10.0
libtpu: 0.0.40
codegen_flags: <defaults>
</compile_context>

<pallas_src>
import functools
import math

import jax
import jax.numpy as jnp
from jax.experimental import pallas as pl
from jax.experimental.pallas import tpu as pltpu


def _round_up(x, m):
    return ((x + m - 1) // m) * m


def _pick_tile(padded_dim, max_tile, align):
    """Largest multiple of `align` that divides `padded_dim` and is <= max_tile."""
    max_tile = max(align, (max_tile // align) * align)
    if padded_dim <= max_tile:
        return padded_dim
    t = max_tile
    while t >= align:
        if padded_dim % t == 0:
            return t
        t -= align
    return align


def _pad2d(a, rows, cols, dtype):
    r, c = a.shape
    return jnp.pad(a.astype(dtype), ((0, rows - r), (0, cols - c)))


# --------------------- generic tiled matmul (+bias, +relu) -------------------

def _mm_bias_kernel(a_ref, b_ref, bias_ref, o_ref, acc_ref, *, relu):
    # grid = (i: M tiles [parallel], j: N tiles [parallel], k: K tiles [arbitrary])
    @pl.when(pl.program_id(2) == 0)
    def _():
        acc_ref[...] = jnp.zeros_like(acc_ref)

    acc_ref[...] += jnp.dot(a_ref[...], b_ref[...],
                            preferred_element_type=jnp.float32)

    @pl.when(pl.program_id(2) == pl.num_programs(2) - 1)
    def _():
        out = acc_ref[...] + bias_ref[...]
        if relu:
            out = jnp.maximum(out, 0.0)
        o_ref[...] = out.astype(o_ref.dtype)


def _mm_bias_kernel_1k(a_ref, b_ref, bias_ref, o_ref, *, relu):
    # Single K step: skip the f32 scratch and init/finalize branches entirely.
    out = jnp.dot(a_ref[...], b_ref[...],
                  preferred_element_type=jnp.float32) + bias_ref[...]
    if relu:
        out = jnp.maximum(out, 0.0)
    o_ref[...] = out.astype(o_ref.dtype)


def matmul_bias_padded(a_p, b_p, bias_p, *, relu=False, out_dtype=jnp.bfloat16,
                       tile_m, tile_n, tile_k):
    """out = act(a_p @ b_p + bias_p) on pre-padded / pre-cast operands.

    a_p: (Mp, Kp) bf16, b_p: (Kp, Np) bf16, bias_p: (1, Np) f32; tiles divide
    the padded dims exactly.  Returns (Mp, Np) in out_dtype (still padded).
    """
    Mp, Kp = a_p.shape
    Kp2, Np = b_p.shape
    assert Kp == Kp2, (a_p.shape, b_p.shape)
    grid = (Mp // tile_m, Np // tile_n, Kp // tile_k)
    single_k = grid[2] == 1

    out_bytes = Mp * Np * jnp.dtype(out_dtype).itemsize
    cost = pl.CostEstimate(
        flops=2 * Mp * Np * Kp,
        transcendentals=0,
        bytes_accessed=(a_p.size * a_p.dtype.itemsize
                        + b_p.size * b_p.dtype.itemsize
                        + bias_p.size * 4 + out_bytes),
    )

    if single_k:
        kernel = functools.partial(_mm_bias_kernel_1k, relu=relu)
        scratch = []
    else:
        kernel = functools.partial(_mm_bias_kernel, relu=relu)
        scratch = [pltpu.VMEM((tile_m, tile_n), jnp.float32)]

    return pl.pallas_call(
        kernel,
        out_shape=jax.ShapeDtypeStruct((Mp, Np), out_dtype),
        grid_spec=pltpu.PrefetchScalarGridSpec(
            num_scalar_prefetch=0,
            grid=grid,
            in_specs=[
                pl.BlockSpec((tile_m, tile_k), lambda i, j, k: (i, k)),   # A
                pl.BlockSpec((tile_k, tile_n), lambda i, j, k: (k, j)),   # B
                pl.BlockSpec((1, tile_n), lambda i, j, k: (0, j)),        # bias
            ],
            out_specs=pl.BlockSpec((tile_m, tile_n), lambda i, j, k: (i, j)),
            scratch_shapes=scratch,
        ),
        compiler_params=pltpu.CompilerParams(
            dimension_semantics=("parallel", "parallel", "arbitrary"),
        ),
        cost_estimate=cost,
    )(a_p, b_p, bias_p)


# ----- fused gc1 epilogue + gc2 support:  s2 = relu(adj @ s1 + b1) @ W2 ------

def _fused_gc_kernel(adj_ref, s1_ref, b1_ref, w2_ref, o_ref, acc_ref):
    # grid = (i: M tiles [parallel], k: K(node) tiles [arbitrary])
    @pl.when(pl.program_id(1) == 0)
    def _():
        acc_ref[...] = jnp.zeros_like(acc_ref)

    acc_ref[...] += jnp.dot(adj_ref[...], s1_ref[...],
                            preferred_element_type=jnp.float32)

    @pl.when(pl.program_id(1) == pl.num_programs(1) - 1)
    def _():
        h1 = jnp.maximum(acc_ref[...] + b1_ref[...], 0.0)   # gc1 bias + relu
        o_ref[...] = jnp.dot(h1.astype(w2_ref.dtype), w2_ref[...],
                             preferred_element_type=jnp.float32).astype(o_ref.dtype)


def _fused_gc_kernel_1k(adj_ref, s1_ref, b1_ref, w2_ref, o_ref):
    acc = jnp.dot(adj_ref[...], s1_ref[...], preferred_element_type=jnp.float32)
    h1 = jnp.maximum(acc + b1_ref[...], 0.0)
    o_ref[...] = jnp.dot(h1.astype(w2_ref.dtype), w2_ref[...],
                         preferred_element_type=jnp.float32).astype(o_ref.dtype)


def fused_gc1_support2_padded(adj_p, s1_p, b1_p, w2_p, *, out_dtype=jnp.bfloat16,
                              tile_m, tile_k):
    """s2 = relu(adj_p @ s1_p + b1_p) @ w2_p on pre-padded operands.

    W2 is kept VMEM-resident (constant-index full-array BlockSpec); h1 never
    touches HBM.  Returns (Mp, Op) in out_dtype (still padded).
    """
    Mp, Kp = adj_p.shape
    Kp2, Hp = s1_p.shape
    Hp2, Op = w2_p.shape
    assert Kp == Kp2 and Hp == Hp2, (adj_p.shape, s1_p.shape, w2_p.shape)
    grid = (Mp // tile_m, Kp // tile_k)
    single_k = grid[1] == 1

    cost = pl.CostEstimate(
        flops=2 * Mp * Hp * Kp + 2 * Mp * Op * Hp,
        transcendentals=0,
        bytes_accessed=((adj_p.size + s1_p.size + w2_p.size) * 2
                        + b1_p.size * 4
                        + Mp * Op * jnp.dtype(out_dtype).itemsize),
    )

    if single_k:
        kernel = _fused_gc_kernel_1k
        scratch = []
    else:
        kernel = _fused_gc_kernel
        scratch = [pltpu.VMEM((tile_m, Hp), jnp.float32)]

    return pl.pallas_call(
        kernel,
        out_shape=jax.ShapeDtypeStruct((Mp, Op), out_dtype),
        grid_spec=pltpu.PrefetchScalarGridSpec(
            num_scalar_prefetch=0,
            grid=grid,
            in_specs=[
                pl.BlockSpec((tile_m, tile_k), lambda i, k: (i, k)),   # adj
                pl.BlockSpec((tile_k, Hp), lambda i, k: (k, 0)),       # s1
                pl.BlockSpec((1, Hp), lambda i, k: (0, 0)),            # b1
                pl.BlockSpec((Hp, Op), lambda i, k: (0, 0)),           # W2 (resident)
            ],
            out_specs=pl.BlockSpec((tile_m, Op), lambda i, k: (i, 0)),
            scratch_shapes=scratch,
        ),
        compiler_params=pltpu.CompilerParams(
            dimension_semantics=("parallel", "arbitrary"),
        ),
        cost_estimate=cost,
    )(adj_p, s1_p, b1_p, w2_p)


# ------------------------------- forward -------------------------------------

def gpn_encoder_forward(x, adj, params, *, dropout=0.5, training=False,
                        compute_dtype=jnp.bfloat16):
    """GPN_Encoder.forward: gc2(dropout(relu(gc1(x, adj))), adj)."""
    w1, b1, w2, b2 = params
    n_nodes, nfeat = x.shape
    nhid2 = w1.shape[1]            # 2 * nhid
    nhid = w2.shape[1]

    # Padded dims (node dim padded to a lane multiple so gc1's output rows can
    # feed gc2's contraction axis without any repacking in between).
    NN = _round_up(n_nodes, 128)
    Fp = _round_up(nfeat, 128)
    Hp = _round_up(nhid2, 128)
    Op = _round_up(nhid, 128)

    # Tile choices (divisors of the padded dims -> no tile-multiple over-pad).
    tm_adj = _pick_tile(NN, 1024, 128)   # big M tile: support streamed once per tile
    tk_adj = _pick_tile(NN, 512, 128)
    tm_x = _pick_tile(NN, 512, 128)
    tk_x = _pick_tile(Fp, 512, 128)
    tn_x = _pick_tile(Hp, 512, 128)
    tn_out = _pick_tile(Op, 512, 128)

    # Hoisted casts/pads: adj (the dominant HBM stream) is prepared ONCE and
    # reused by both adj@support GEMMs; weights/biases likewise.
    adj_p = _pad2d(adj, NN, NN, compute_dtype)
    x_p = _pad2d(x, NN, Fp, compute_dtype)
    w1_p = _pad2d(w1, Fp, Hp, compute_dtype)
    w2_p = _pad2d(w2, Hp, Op, compute_dtype)
    b1_p = jnp.pad(b1.astype(jnp.float32).reshape(1, -1), ((0, 0), (0, Hp - nhid2)))
    b2_p = jnp.pad(b2.astype(jnp.float32).reshape(1, -1), ((0, 0), (0, Op - nhid)))
    zero_bias_h = jnp.zeros((1, Hp), jnp.float32)

    # gc1 hoisted support: s1 = x @ W1   (rows already padded to NN).
    s1_p = matmul_bias_padded(x_p, w1_p, zero_bias_h, relu=False,
                              out_dtype=compute_dtype,
                              tile_m=tm_x, tile_n=tn_x, tile_k=tk_x)

    # TODO(synk): dropout between gc1 and gc2 is an inference no-op here
    # (training=False); training-mode parity would need pltpu.prng_seed /
    # prng_random_bits masking of h1 inside the fused kernel.
    del dropout, training

    if Hp <= 1024:
        # Fused: s2 = relu(adj @ s1 + b1) @ W2  -- no h1 HBM round trip.
        s2_p = fused_gc1_support2_padded(adj_p, s1_p, b1_p, w2_p,
                                         out_dtype=compute_dtype,
                                         tile_m=tm_adj, tile_k=tk_adj)
    else:
        # Fallback for very wide hidden dims: unfused (h1 materialized).
        tn_h = _pick_tile(Hp, 512, 128)
        h1_p = matmul_bias_padded(adj_p, s1_p, b1_p, relu=True,
                                  out_dtype=compute_dtype,
                                  tile_m=tm_adj, tile_n=tn_h, tile_k=tk_adj)
        s2_p = matmul_bias_padded(h1_p, w2_p, jnp.zeros((1, Op), jnp.float32),
                                  relu=False, out_dtype=compute_dtype,
                                  tile_m=tm_x, tile_n=tn_out,
                                  tile_k=_pick_tile(Hp, 512, 128))

    # gc2: out = adj @ s2 + b2  (reuses the same padded bf16 adj).
    out_p = matmul_bias_padded(adj_p, s2_p, b2_p, relu=False,
                               out_dtype=jnp.float32,
                               tile_m=tm_adj, tile_n=tn_out, tile_k=tk_adj)

    return out_p[:n_nodes, :nhid]


def init_gpn_encoder_params(key, nfeat, nhid):
    # Mirrors GraphConvolution.reset_parameters: U(-stdv, stdv), stdv=1/sqrt(out_features)
    k1w, k1b, k2w, k2b = jax.random.split(key, 4)
    stdv1 = 1.0 / math.sqrt(2 * nhid)
    w1 = jax.random.uniform(k1w, (nfeat, 2 * nhid), jnp.float32, -stdv1, stdv1)
    b1 = jax.random.uniform(k1b, (2 * nhid,), jnp.float32, -stdv1, stdv1)
    stdv2 = 1.0 / math.sqrt(nhid)
    w2 = jax.random.uniform(k2w, (2 * nhid, nhid), jnp.float32, -stdv2, stdv2)
    b2 = jax.random.uniform(k2b, (nhid,), jnp.float32, -stdv2, stdv2)
    return w1, b1, w2, b2


if __name__ == "__main__":
    base_key = jax.random.PRNGKey(0)

    def run_case(case_key, n_nodes, nfeat, nhid, density=0.3):
        k_x, k_adj, k_p = jax.random.split(case_key, 3)
        x = jax.random.normal(k_x, (n_nodes, nfeat), jnp.float32)

        # Symmetric, row-normalized dense adjacency (torch.spmm on dense is identical).
        a = (jax.random.uniform(k_adj, (n_nodes, n_nodes)) < density).astype(jnp.float32)
        adj = a + a.T + jnp.eye(n_nodes, dtype=jnp.float32)
        adj = adj / jnp.sum(adj, axis=1, keepdims=True)

        params = init_gpn_encoder_params(k_p, nfeat, nhid)
        out = gpn_encoder_forward(x, adj, params, dropout=0.5, training=False)
        out = jax.block_until_ready(out)

        # Pure f32 reference (kernel uses bf16 MXU operands -> loose tolerance).
        w1, b1, w2, b2 = params
        h1_ref = jnp.maximum(adj @ (x @ w1) + b1[None, :], 0.0)
        ref = adj @ (h1_ref @ w2) + b2[None, :]

        assert out.shape == ref.shape, (out.shape, ref.shape)
        max_err = float(jnp.max(jnp.abs(out - ref)))
        assert jnp.allclose(out, ref, atol=5e-2, rtol=5e-2), (
            f"mismatch vs reference (max abs err {max_err})")

    # Small case: every grid collapses to one tile (single-K, no-scratch path).
    run_case(base_key, n_nodes=16, nfeat=16, nhid=32)
    # Larger case: exercises multi-M and multi-K grids (accumulator kernels).
    run_case(jax.random.fold_in(base_key, 1), n_nodes=600, nfeat=257, nhid=96)

    print("KERNEL_OK")
</pallas_src>

<mosaic_0001>
module attributes {stable_mosaic.version = 11 : i64} {
  func.func @_mm_bias_kernel_1k(%arg0: i32, %arg1: i32, %arg2: i32, %arg3: memref<128x128xbf16, #tpu.memory_space<vmem>>, %arg4: memref<128x128xbf16, #tpu.memory_space<vmem>>, %arg5: memref<1x128xf32, #tpu.memory_space<vmem>>, %arg6: memref<128x128xbf16, #tpu.memory_space<vmem>>) attributes {dimension_semantics = [#tpu.dimension_semantics<parallel>, #tpu.dimension_semantics<parallel>, #tpu.dimension_semantics<arbitrary>], iteration_bounds = array<i64: 1, 1, 1>, scalar_prefetch = 0 : i64, scratch_operands = 0 : i64, tpu.core_type = #tpu.core_type<tc>, window_params = [{transform_indices = @transform_0, window_bounds = array<i64: 128, 128>}, {transform_indices = @transform_1, window_bounds = array<i64: 128, 128>}, {transform_indices = @transform_2, window_bounds = array<i64: 1, 128>}, {transform_indices = @transform_3, window_bounds = array<i64: 128, 128>}]} {
    %c0 = arith.constant 0 : index
    %c0_0 = arith.constant 0 : index
    %0 = vector.load %arg3[%c0, %c0_0] : memref<128x128xbf16, #tpu.memory_space<vmem>>, vector<128x128xbf16>
    %c0_1 = arith.constant 0 : index
    %c0_2 = arith.constant 0 : index
    %1 = vector.load %arg4[%c0_1, %c0_2] : memref<128x128xbf16, #tpu.memory_space<vmem>>, vector<128x128xbf16>
    %cst = arith.constant dense<0.000000e+00> : vector<128x128xf32>
    %2 = tpu.matmul %0, %1, %cst {dimension_numbers = #tpu.dot_dimension_numbers<[1], [0], [0], [1], [0, 0, 1, 1], [], []>} : vector<128x128xbf16>, vector<128x128xbf16>, vector<128x128xf32> -> vector<128x128xf32>
    %c0_3 = arith.constant 0 : index
    %c0_4 = arith.constant 0 : index
    %3 = vector.load %arg5[%c0_3, %c0_4] : memref<1x128xf32, #tpu.memory_space<vmem>>, vector<1x128xf32>
    %4 = vector.broadcast %3 : vector<1x128xf32> to vector<128x128xf32>
    %5 = arith.addf %2, %4 : vector<128x128xf32>
    %6 = arith.truncf %5 : vector<128x128xf32> to vector<128x128xbf16>
    %c0_5 = arith.constant 0 : index
    %c0_6 = arith.constant 0 : index
    %7 = vector.load %arg6[%c0_5, %c0_6] : memref<128x128xbf16, #tpu.memory_space<vmem>>, vector<128x128xbf16>
    tpu.vector_store %arg6[%c0_5, %c0_6], %6 {strides = array<i32>} : memref<128x128xbf16, #tpu.memory_space<vmem>>, vector<128x128xbf16>,
    return
  }
  func.func @transform_0(%arg0: i32, %arg1: i32, %arg2: i32) -> (i32, i32) {
    %c0_i32 = arith.constant 0 : i32
    return %arg0, %arg2 : i32, i32
  }
  func.func @transform_1(%arg0: i32, %arg1: i32, %arg2: i32) -> (i32, i32) {
    %c0_i32 = arith.constant 0 : i32
    return %arg2, %arg1 : i32, i32
  }
  func.func @transform_2(%arg0: i32, %arg1: i32, %arg2: i32) -> (i32, i32) {
    %c0_i32 = arith.constant 0 : i32
    %c0_i32_0 = arith.constant 0 : i32
    return %c0_i32, %arg1 : i32, i32
  }
  func.func @transform_3(%arg0: i32, %arg1: i32, %arg2: i32) -> (i32, i32) {
    %c0_i32 = arith.constant 0 : i32
    return %arg0, %arg1 : i32, i32
  }
}

</mosaic_0001>

<llo_original>
// kernel: tpu_custom_call.1
$region0: #{tpu_custom_call.1}
  #allocation0 [shape = 'u32[]', space=smem, size = 0x4, offset = 0x4, fixed_abs, tag = 'smem constant byte address 0x4 - core index']
  #allocation1 [shape = 'u32[144,128]{1,0:T(1,128)}', space=vmem, size = 0x12000, scoped, tag = 'internal scratch']
  %s0 = inlined_call_operand.hbm [shape: bf16[128,128], index: 0, kind: input, shape index: {}]
  %s1 = inlined_call_operand.hbm [shape: bf16[128,128], index: 1, kind: input, shape index: {}]
  %s2 = inlined_call_operand.vmem [shape: f32[1,128], index: 2, kind: input, shape index: {}]
  %s3 = inlined_call_operand.hbm [shape: bf16[128,128], index: 3, kind: output, shape index: {}]
  %s4 = sld [smem:[#allocation0]]
  $region30: #{tpu_custom_call.1} parent=0
    _
  %s6 = ssub.s32 1, %s4
  %s7 = scalar_select 0, %s6, %s4
  $region1: #{tpu_custom_call.1} parent=0
    #allocation2 [shape = 'u8[32768]{0}', space=vmem, size = 0x8000, scoped, tag = 'input window, operand 0, single buffered']
    #allocation3 [shape = 's32[1]{0}', space=sflag, size = 0x4, scoped, tag = 'scoped memory for tpu_custom_call.1']
    #allocation4 [shape = 's32[1]{0}', space=sflag, size = 0x4, scoped, tag = 'scoped memory for tpu_custom_call.1']
    #allocation5 [shape = 'u8[32768]{0}', space=vmem, size = 0x8000, scoped, tag = 'input window, operand 1, single buffered']
    #allocation6 [shape = 's32[1]{0}', space=sflag, size = 0x4, scoped, tag = 'scoped memory for tpu_custom_call.1']
    #allocation7 [shape = 'u8[32768]{0}', space=vmem, size = 0x8000, scoped, tag = 'output window, operand 0, single buffered']
    %8 = vsyncpa [#allocation3], 0
    %9 = vsyncpa [#allocation6], 0
    %10 = vsyncpa [#allocation4], 0
    // Predicated region
    $region2: #{tpu_custom_call.1} parent=1 // pred_check
      _
    $region3: #{tpu_custom_call.1} parent=1 // pred_check_branch
      %12 = sbr.rel (0) target = $region5
    $region4: #{tpu_custom_call.1} parent=1 // pred_region
      %s14 = ssub.s32 1024, 1024
      %15 = vsyncadd [#allocation3], %s14
      %s16 = sshll.u32 [#allocation2], 4
      %s17 = int_to_ptr.vmem [resolvable:$true] %s16
      %22 = dma.hbm_to_vmem [thread:$0]  %s0, 1024, %s17, [#allocation3], 64, 64, 4
    $region5: #{tpu_custom_call.1} parent=1 // pred_fallthru
      _
    // Predicated region
    $region6: #{tpu_custom_call.1} parent=1 // pred_check
      _
    $region7: #{tpu_custom_call.1} parent=1 // pred_check_branch
      %24 = sbr.rel (0) target = $region9
    $region8: #{tpu_custom_call.1} parent=1 // pred_region
      %s26 = ssub.s32 1024, 1024
      %27 = vsyncadd [#allocation6], %s26
      %s28 = sshll.u32 [#allocation5], 4
      %s29 = int_to_ptr.vmem [resolvable:$true] %s28
      %34 = dma.hbm_to_vmem [thread:$0]  %s1, 1024, %s29, [#allocation6], 64, 64, 4
    $region9: #{tpu_custom_call.1} parent=1 // pred_fallthru
      _
    // Predicated region
    $region10: #{tpu_custom_call.1} parent=1 // pred_check
      _
    $region11: #{tpu_custom_call.1} parent=1 // pred_check_branch
      %36 = sbr.rel (0) target = $region13
    $region12: #{tpu_custom_call.1} parent=1 // pred_region
      _
    $region13: #{tpu_custom_call.1} parent=1 // pred_fallthru
      _
    // Predicated region
    $region14: #{tpu_custom_call.1} parent=1 // pred_check
      _
    $region15: #{tpu_custom_call.1} parent=1 // pred_check_branch
      %38 = sbr.rel (0) target = $region17
    $region16: #{tpu_custom_call.1} parent=1 // pred_region
      %39 = dma.done [#allocation3], 1024
    $region17: #{tpu_custom_call.1} parent=1 // pred_fallthru
      _
    // Predicated region
    $region18: #{tpu_custom_call.1} parent=1 // pred_check
      _
    $region19: #{tpu_custom_call.1} parent=1 // pred_check_branch
      %41 = sbr.rel (0) target = $region21
    $region20: #{tpu_custom_call.1} parent=1 // pred_region
      %42 = dma.done [#allocation6], 1024
    $region21: #{tpu_custom_call.1} parent=1 // pred_fallthru
      _
    %v44 = vld [vmem:[#allocation2] sm:$0xf]
    %v45 = vld [vmem:[#allocation2 + $0x4] sm:$0xf]
    %v46 = vld [vmem:[#allocation2 + $0x8] sm:$0xf]
    %v47 = vld [vmem:[#allocation2 + $0xc] sm:$0xf]
    %v48 = vld [vmem:[#allocation2 + $0x10] sm:$0xf]
    %v49 = vld [vmem:[#allocation2 + $0x14] sm:$0xf]
    %v50 = vld [vmem:[#allocation2 + $0x18] sm:$0xf]
    %v51 = vld [vmem:[#allocation2 + $0x1c] sm:$0xf]
    %v52 = vld [vmem:[#allocation2 + $0x20] sm:$0xf]
    %v53 = vld [vmem:[#allocation2 + $0x24] sm:$0xf]
    %v54 = vld [vmem:[#allocation2 + $0x28] sm:$0xf]
    %v55 = vld [vmem:[#allocation2 + $0x2c] sm:$0xf]
    %v56 = vld [vmem:[#allocation2 + $0x30] sm:$0xf]
    %v57 = vld [vmem:[#allocation2 + $0x34] sm:$0xf]
    %v58 = vld [vmem:[#allocation2 + $0x38] sm:$0xf]
    %v59 = vld [vmem:[#allocation2 + $0x3c] sm:$0xf]
    %v60 = vld [vmem:[#allocation5] sm:$0xf]
    %v61 = vld [vmem:[#allocation5 + $0x4] sm:$0xf]
    %v62 = vld [vmem:[#allocation5 + $0x8] sm:$0xf]
    %v63 = vld [vmem:[#allocation5 + $0xc] sm:$0xf]
    %v64 = vld [vmem:[#allocation5 + $0x10] sm:$0xf]
    %v65 = vld [vmem:[#allocation5 + $0x14] sm:$0xf]
    %v66 = vld [vmem:[#allocation5 + $0x18] sm:$0xf]
    %v67 = vld [vmem:[#allocation5 + $0x1c] sm:$0xf]
    %v68 = vld [vmem:[#allocation5 + $0x20] sm:$0xf]
    %v69 = vld [vmem:[#allocation5 + $0x24] sm:$0xf]
    %v70 = vld [vmem:[#allocation5 + $0x28] sm:$0xf]
    %v71 = vld [vmem:[#allocation5 + $0x2c] sm:$0xf]
    %v72 = vld [vmem:[#allocation5 + $0x30] sm:$0xf]
    %v73 = vld [vmem:[#allocation5 + $0x34] sm:$0xf]
    %v74 = vld [vmem:[#allocation5 + $0x38] sm:$0xf]
    %v75 = vld [vmem:[#allocation5 + $0x3c] sm:$0xf]
    %v76 = vld [vmem:[%s2] sm:$0x1]
    %v78 = vlaneseq
    %v79 = vshrl.u32 %v78, 7
    %v80 = vsub.s32 0, %v79
    %v81 = vrot.slane %v76, %v80
    %v99 = vunpack.c.l.b16 %v44
    %v100 = vunpack.c.l.b16 %v45
    %v101 = vunpack.c.l.b16 %v46
    %v102 = vunpack.c.l.b16 %v47
    %v103 = vunpack.c.l.b16 %v48
    %v104 = vunpack.c.l.b16 %v49
    %v105 = vunpack.c.l.b16 %v50
    %v106 = vunpack.c.l.b16 %v51
    %v107 = vunpack.c.l.b16 %v52
    %v108 = vunpack.c.l.b16 %v53
    %v109 = vunpack.c.l.b16 %v54
    %v110 = vunpack.c.l.b16 %v55
    %v111 = vunpack.c.l.b16 %v56
    %v112 = vunpack.c.l.b16 %v57
    %v113 = vunpack.c.l.b16 %v58
    %v114 = vunpack.c.l.b16 %v59
    %v115 = vpack.c.b16 %v100, %v99
    %v116 = vpack.c.b16 %v102, %v101
    %v117 = vpack.c.b16 %v104, %v103
    %v118 = vpack.c.b16 %v106, %v105
    %v119 = vpack.c.b16 %v108, %v107
    %v120 = vpack.c.b16 %v110, %v109
    %v121 = vpack.c.b16 %v112, %v111
    %v122 = vpack.c.b16 %v114, %v113
    %v147 = vunpack.c.l.b16 %v60
    %v148 = vunpack.c.l.b16 %v61
    %v149 = vunpack.c.l.b16 %v62
    %v150 = vunpack.c.l.b16 %v63
    %v151 = vunpack.c.l.b16 %v64
    %v152 = vunpack.c.l.b16 %v65
    %v153 = vunpack.c.l.b16 %v66
    %v154 = vunpack.c.l.b16 %v67
    %v155 = vunpack.c.l.b16 %v68
    %v156 = vunpack.c.l.b16 %v69
    %v157 = vunpack.c.l.b16 %v70
    %v158 = vunpack.c.l.b16 %v71
    %v159 = vunpack.c.l.b16 %v72
    %v160 = vunpack.c.l.b16 %v73
    %v161 = vunpack.c.l.b16 %v74
    %v162 = vunpack.c.l.b16 %v75
    %v163 = vpack.c.b16 %v148, %v147
    %v164 = vpack.c.b16 %v150, %v149
    %v165 = vpack.c.b16 %v152, %v151
    %v166 = vpack.c.b16 %v154, %v153
    %v167 = vpack.c.b16 %v156, %v155
    %v168 = vpack.c.b16 %v158, %v157
    %v169 = vpack.c.b16 %v160, %v159
    %v170 = vpack.c.b16 %v162, %v161
    %179 = vmatprep.subr.bf16.mxu0 0
    %180 = vmatpush1.bf16.msra.mxu0 %v170
    %181 = vmatprep.subr.bf16.mxu0 0
    %182 = vmatpush1.bf16.msra.mxu0 %v169
    %183 = vmatprep.subr.bf16.mxu0 0
    %184 = vmatpush1.bf16.msra.mxu0 %v168
    %185 = vmatprep.subr.bf16.mxu0 0
    %186 = vmatpush1.bf16.msra.mxu0 %v167
    %187 = vmatprep.subr.bf16.mxu0 0
    %188 = vmatpush1.bf16.msra.mxu0 %v166
    %189 = vmatprep.subr.bf16.mxu0 0
    %190 = vmatpush1.bf16.msra.mxu0 %v165
    %191 = vmatprep.subr.bf16.mxu0 0
    %192 = vmatpush1.bf16.msra.mxu0 %v164
    %193 = vmatprep.subr.bf16.mxu0 0
    %194 = vmatpush1.bf16.msra.mxu0 %v163
    %195 = vmatprep.subr.bf16.mxu0 0
    %196 = vmatpush2.bf16.msra.mxu0 0
    %197 = vmatprep.subr.bf16.mxu0 0
    %198 = vmatpush2.bf16.msra.mxu0 0
    %199 = vmatprep.subr.bf16.mxu0 0
    %200 = vmatpush2.bf16.msra.mxu0 0
    %201 = vmatprep.subr.bf16.mxu0 0
    %202 = vmatpush2.bf16.msra.mxu0 0
    %203 = vmatprep.subr.bf16.mxu0 0
    %204 = vmatpush2.bf16.msra.mxu0 0
    %205 = vmatprep.subr.bf16.mxu0 0
    %206 = vmatpush2.bf16.msra.mxu0 0
    %207 = vmatprep.subr.bf16.mxu0 0
    %208 = vmatpush2.bf16.msra.mxu0 0
    %209 = vmatprep.subr.bf16.mxu0 0
    %210 = vmatpush2.bf16.msra.mxu0 0
    %211 = vmatprep.mubr.bf16.mxu0 0
    %212 = vmatmul.mubr.bf16.gmra.mxu0 %v115
    %v213 = vpop.f32.mrf.mxu0
    %v214 = vadd.f32 %v81, %v213
    %v215 = vpop.f32.mrf.mxu0
    %v216 = vpop.f32.mrf.mxu0
    %v217 = vadd.f32 %v81, %v216
    %v218 = vpop.f32.mrf.mxu0
    %219 = vmatprep.mubr.bf16.mxu0 0
    %220 = vmatmul.mubr.bf16.gmra.mxu0 %v116
    %v221 = vpop.f32.mrf.mxu0
    %v222 = vadd.f32 %v81, %v221
    %v223 = vpop.f32.mrf.mxu0
    %v224 = vpop.f32.mrf.mxu0
    %v225 = vadd.f32 %v81, %v224
    %v226 = vpop.f32.mrf.mxu0
    %227 = vmatprep.mubr.bf16.mxu0 0
    %228 = vmatmul.mubr.bf16.gmra.mxu0 %v117
    %v229 = vpop.f32.mrf.mxu0
    %v230 = vadd.f32 %v81, %v229
    %v231 = vpop.f32.mrf.mxu0
    %v232 = vpop.f32.mrf.mxu0
    %v233 = vadd.f32 %v81, %v232
    %v234 = vpop.f32.mrf.mxu0
    %235 = vmatprep.mubr.bf16.mxu0 0
    %236 = vmatmul.mubr.bf16.gmra.mxu0 %v118
    %v237 = vpop.f32.mrf.mxu0
    %v238 = vadd.f32 %v81, %v237
    %v239 = vpop.f32.mrf.mxu0
    %v240 = vpop.f32.mrf.mxu0
    %v241 = vadd.f32 %v81, %v240
    %v242 = vpop.f32.mrf.mxu0
    %243 = vmatprep.mubr.bf16.mxu0 0
    %244 = vmatmul.mubr.bf16.gmra.mxu0 %v119
    %v245 = vpop.f32.mrf.mxu0
    %v246 = vadd.f32 %v81, %v245
    %v247 = vpop.f32.mrf.mxu0
    %v248 = vpop.f32.mrf.mxu0
    %v249 = vadd.f32 %v81, %v248
    %v250 = vpop.f32.mrf.mxu0
    %251 = vmatprep.mubr.bf16.mxu0 0
    %252 = vmatmul.mubr.bf16.gmra.mxu0 %v120
    %v253 = vpop.f32.mrf.mxu0
    %v254 = vadd.f32 %v81, %v253
    %v255 = vpop.f32.mrf.mxu0
    %v256 = vpop.f32.mrf.mxu0
    %v257 = vadd.f32 %v81, %v256
    %v258 = vpop.f32.mrf.mxu0
    %259 = vmatprep.mubr.bf16.mxu0 0
    %260 = vmatmul.mubr.bf16.gmra.mxu0 %v121
    %v261 = vpop.f32.mrf.mxu0
    %v262 = vadd.f32 %v81, %v261
    %v263 = vpop.f32.mrf.mxu0
    %v264 = vpop.f32.mrf.mxu0
    %v265 = vadd.f32 %v81, %v264
    %v266 = vpop.f32.mrf.mxu0
    %267 = vmatprep.mubr.bf16.mxu0 0
    %268 = vmatmul.mubr.bf16.gmra.mxu0 %v122
    %v269 = vpop.f32.mrf.mxu0
    %v270 = vadd.f32 %v81, %v269
    %v271 = vpop.f32.mrf.mxu0
    %v272 = vpop.f32.mrf.mxu0
    %v273 = vadd.f32 %v81, %v272
    %v274 = vpop.f32.mrf.mxu0
    %275 = vdwg.mxu0
    %v276 = vpack.c.bf16 %v217, %v214
    %v277 = vpack.c.bf16 %v225, %v222
    %v278 = vpack.c.bf16 %v233, %v230
    %v279 = vpack.c.bf16 %v241, %v238
    %v280 = vpack.c.bf16 %v249, %v246
    %v281 = vpack.c.bf16 %v257, %v254
    %v282 = vpack.c.bf16 %v265, %v262
    %v283 = vpack.c.bf16 %v273, %v270
    %v292 = vunpack.c.l.b16 %v276
    %v293 = vunpack.c.h.b16 %v276
    %v294 = vunpack.c.l.b16 %v277
    %v295 = vunpack.c.h.b16 %v277
    %v296 = vunpack.c.l.b16 %v278
    %v297 = vunpack.c.h.b16 %v278
    %v298 = vunpack.c.l.b16 %v279
    %v299 = vunpack.c.h.b16 %v279
    %v300 = vunpack.c.l.b16 %v280
    %v301 = vunpack.c.h.b16 %v280
    %v302 = vunpack.c.l.b16 %v281
    %v303 = vunpack.c.h.b16 %v281
    %v304 = vunpack.c.l.b16 %v282
    %v305 = vunpack.c.h.b16 %v282
    %v306 = vunpack.c.l.b16 %v283
    %v307 = vunpack.c.h.b16 %v283
    %v308 = vpack.c.b16 %v292, %v292
    %v309 = vpack.c.b16 %v293, %v293
    %v310 = vpack.c.b16 %v294, %v294
    %v311 = vpack.c.b16 %v295, %v295
    %v312 = vpack.c.b16 %v296, %v296
    %v313 = vpack.c.b16 %v297, %v297
    %v314 = vpack.c.b16 %v298, %v298
    %v315 = vpack.c.b16 %v299, %v299
    %v316 = vpack.c.b16 %v300, %v300
    %v317 = vpack.c.b16 %v301, %v301
    %v318 = vpack.c.b16 %v302, %v302
    %v319 = vpack.c.b16 %v303, %v303
    %v320 = vpack.c.b16 %v304, %v304
    %v321 = vpack.c.b16 %v305, %v305
    %v322 = vpack.c.b16 %v306, %v306
    %v323 = vpack.c.b16 %v307, %v307
    %340 = vst [vmem:[#allocation7] sm:$0xf] %v308
    %341 = vst [vmem:[#allocation7 + $0x4] sm:$0xf] %v309
    %342 = vst [vmem:[#allocation7 + $0x8] sm:$0xf] %v310
    %343 = vst [vmem:[#allocation7 + $0xc] sm:$0xf] %v311
    %344 = vst [vmem:[#allocation7 + $0x10] sm:$0xf] %v312
    %345 = vst [vmem:[#allocation7 + $0x14] sm:$0xf] %v313
    %346 = vst [vmem:[#allocation7 + $0x18] sm:$0xf] %v314
    %347 = vst [vmem:[#allocation7 + $0x1c] sm:$0xf] %v315
    %348 = vst [vmem:[#allocation7 + $0x20] sm:$0xf] %v316
    %349 = vst [vmem:[#allocation7 + $0x24] sm:$0xf] %v317
    %350 = vst [vmem:[#allocation7 + $0x28] sm:$0xf] %v318
    %351 = vst [vmem:[#allocation7 + $0x2c] sm:$0xf] %v319
    %352 = vst [vmem:[#allocation7 + $0x30] sm:$0xf] %v320
    %353 = vst [vmem:[#allocation7 + $0x34] sm:$0xf] %v321
    %354 = vst [vmem:[#allocation7 + $0x38] sm:$0xf] %v322
    %355 = vst [vmem:[#allocation7 + $0x3c] sm:$0xf] %v323
    // Predicated region
    $region22: #{tpu_custom_call.1} parent=1 // pred_check
      _
    $region23: #{tpu_custom_call.1} parent=1 // pred_check_branch
      %357 = sbr.rel (0) target = $region25
    $region24: #{tpu_custom_call.1} parent=1 // pred_region
      %s359 = ssub.s32 1024, 1024
      %360 = vsyncadd [#allocation4], %s359
      %s361 = sshll.u32 [#allocation7], 4
      %s362 = int_to_ptr.vmem [resolvable:$true] %s361
      %367 = dma.vmem_to_hbm [thread:$0]  %s362, 1024, %s3, [#allocation4], 64, 64, 4
    $region25: #{tpu_custom_call.1} parent=1 // pred_fallthru
      _
    // Predicated region
    $region26: #{tpu_custom_call.1} parent=1 // pred_check
      _
    $region27: #{tpu_custom_call.1} parent=1 // pred_check_branch
      %369 = sbr.rel (0) target = $region29
    $region28: #{tpu_custom_call.1} parent=1 // pred_region
      %370 = dma.done [#allocation4], 1024
    $region29: #{tpu_custom_call.1} parent=1 // pred_fallthru
      _
    %371 = vsyncpa [#allocation3], 1
    %372 = vsyncpa [#allocation6], 1
    %373 = vsyncpa [#allocation4], 1

</llo_original>
